<compile_context>
chip_gen: v6e
topology: v6e:2x2x1
jax: 0.10.0
libtpu: 0.0.40
codegen_flags: <defaults>
</compile_context>

<pallas_src>
import jax
import jax.numpy as jnp
from jax.experimental import pallas as pl
from jax.experimental.pallas import tpu as pltpu


def _round_up(x, m):
    return (x + m - 1) // m * m


def _cdiv(a, b):
    return (a + b - 1) // b


def swiglu_kernel(x_ref, w1_ref, b1_ref, w2_ref, b2_ref, o_ref):
    """One [tm, D_in] x [D_in, tn] step of both projections + fused SiLU*gate."""
    x = x_ref[...]
    h1 = jnp.dot(x, w1_ref[...], preferred_element_type=jnp.float32)
    h1 = h1 + b1_ref[...].astype(jnp.float32)
    h2 = jnp.dot(x, w2_ref[...], preferred_element_type=jnp.float32)
    h2 = h2 + b2_ref[...].astype(jnp.float32)
    # SiLU(h1) = h1 * sigmoid(h1); exp and the approximate reciprocal both run
    # on the EUP slot, leaving the VPU with only muls/adds per element.
    sig = pl.reciprocal(1.0 + jnp.exp(-h1), approx=True)
    o_ref[...] = (h1 * sig * h2).astype(o_ref.dtype)


def swiglu(x, w1, b1, w2, b2, *, tm=256, tn=512, compute_dtype=None):
    """SwiGLU forward.

    x: [..., D_in]; w1, w2: [D_in, D_h] (transposed vs torch Linear.weight);
    b1, b2: [1, D_h].  Returns [..., D_h] in x.dtype.
    """
    orig_shape = x.shape
    D_in = orig_shape[-1]
    D_h = w1.shape[1]
    M = 1
    for d in orig_shape[:-1]:
        M *= d
    out_dtype = x.dtype

    x2d = x.reshape(M, D_in)
    if compute_dtype is not None:  # e.g. jnp.bfloat16 on v6e / v7x
        x2d = x2d.astype(compute_dtype)
        w1 = w1.astype(compute_dtype)
        w2 = w2.astype(compute_dtype)
        # b1/b2 stay un-cast: they are added to the f32 accumulator.

    in_item = jnp.dtype(x2d.dtype).itemsize
    out_item = jnp.dtype(out_dtype).itemsize
    b_item = jnp.dtype(b1.dtype).itemsize
    # bf16 packs two rows per sublane (int8/fp8: four) -> dtype-specific
    # minimum row-tile multiple.
    sublane = {4: 8, 2: 16, 1: 32}.get(in_item, 8)

    # --- VMEM budget per TensorCore (v5e/v6e: 128 MiB, v7x: 64 MiB).
    vmem_capacity = 64 * 1024 * 1024  # conservative fallback (v7x)
    try:
        vmem_capacity = int(pltpu.get_tpu_info().vmem_capacity_bytes)
    except Exception:
        pass
    budget = int(vmem_capacity * 0.8)

    def vmem_need(tm_, tn_):
        x_b = 2 * tm_ * D_in * in_item          # double-buffered x tile
        w_b = 2 * 2 * D_in * tn_ * in_item      # double-buffered w1 + w2 tiles
        b_b = 2 * 2 * 8 * tn_ * 4               # biases, sublane-padded
        o_b = 2 * tm_ * tn_ * out_item          # double-buffered out tile
        tmp = 3 * tm_ * tn_ * 4                 # live f32 h1 / h2 / product
        return x_b + w_b + b_b + o_b + tmp

    # --- Tile selection: start big (lane-dense tn, tall tm), shrink to fit.
    tm = min(tm, _round_up(M, sublane))
    tn = min(tn, _round_up(D_h, 128))
    while vmem_need(tm, tn) > budget and tn > 128:
        tn = max(128, 128 * ((tn // 128) // 2))
    while vmem_need(tm, tn) > budget and tm > sublane:
        tm = max(sublane, sublane * ((tm // sublane) // 2))

    num_m = _cdiv(M, tm)
    num_n = _cdiv(D_h, tn)

    # --- Grid order: N-outermost re-reads x num_n times (weights stream
    # once); M-outermost re-reads the weights num_m times (x streams once).
    # Pick whichever wastes less HBM bandwidth for this shape.
    x_bytes = M * D_in * in_item
    w_bytes = 2 * D_in * D_h * in_item
    n_outer = x_bytes * (num_n - 1) <= w_bytes * (num_m - 1)

    if n_outer:
        grid = (num_n, num_m)
        x_map = lambda j, i: (i, 0)
        w_map = lambda j, i: (0, j)
        o_map = lambda j, i: (i, j)
    else:
        grid = (num_m, num_n)
        x_map = lambda i, j: (i, 0)
        w_map = lambda i, j: (0, j)
        o_map = lambda i, j: (i, j)

    x_spec = pl.BlockSpec((tm, D_in), x_map)
    w_spec = pl.BlockSpec((D_in, tn), w_map)
    b_spec = pl.BlockSpec((1, tn), w_map)
    o_spec = pl.BlockSpec((tm, tn), o_map)

    # Cost hint for XLA's scheduler (counts actual x / W re-reads).
    bytes_accessed = (
        x_bytes * (num_n if n_outer else 1)
        + w_bytes * (1 if n_outer else num_m)
        + 2 * D_h * b_item
        + M * D_h * out_item
    )
    cost = pl.CostEstimate(
        flops=int(4 * M * D_in * D_h),       # two matmuls
        transcendentals=int(2 * M * D_h),    # exp + approximate reciprocal
        bytes_accessed=int(bytes_accessed),
    )

    vmem_limit = int(
        min(vmem_capacity, max(vmem_need(tm, tn) + (16 << 20), 32 << 20))
    )

    out = pl.pallas_call(
        swiglu_kernel,
        out_shape=jax.ShapeDtypeStruct((M, D_h), out_dtype),
        grid_spec=pltpu.PrefetchScalarGridSpec(
            num_scalar_prefetch=0,
            grid=grid,
            in_specs=[x_spec, w_spec, b_spec, w_spec, b_spec],
            out_specs=o_spec,
        ),
        compiler_params=pltpu.CompilerParams(
            dimension_semantics=("parallel", "parallel"),
            vmem_limit_bytes=vmem_limit,
        ),
        cost_estimate=cost,
    )(x2d, w1, b1, w2, b2)

    return out.reshape(*orig_shape[:-1], D_h)


def swiglu_ref(x, w1, b1, w2, b2):
    h1 = jnp.einsum("...d,dh->...h", x, w1) + b1[0]
    h2 = jnp.einsum("...d,dh->...h", x, w2) + b2[0]
    return jax.nn.silu(h1) * h2


def _make_inputs(key, B, S, D_in, D_h, dtype=jnp.float32):
    k_x, k_w1, k_b1, k_w2, k_b2 = jax.random.split(key, 5)
    x = jax.random.normal(k_x, (B, S, D_in), dtype=dtype)
    w1 = jax.random.normal(k_w1, (D_in, D_h), dtype=dtype) * 0.05
    b1 = jax.random.normal(k_b1, (1, D_h), dtype=dtype) * 0.05
    w2 = jax.random.normal(k_w2, (D_in, D_h), dtype=dtype) * 0.05
    b2 = jax.random.normal(k_b2, (1, D_h), dtype=dtype) * 0.05
    return x, w1, b1, w2, b2


if __name__ == "__main__":
    key = jax.random.PRNGKey(0)
    k0, k1, k2 = jax.random.split(key, 3)

    # Tolerances are 1e-2 because SiLU uses the EUP approximate reciprocal.

    # Case 1: small shapes consistent with the module:
    # batch=2, seq=8, in_features=32, hidden_features=32, bias=True.
    x, w1, b1, w2, b2 = _make_inputs(k0, 2, 8, 32, 32)
    out = jax.block_until_ready(swiglu(x, w1, b1, w2, b2))
    ref = swiglu_ref(x, w1, b1, w2, b2)
    assert out.shape == ref.shape
    assert jnp.allclose(out, ref, atol=1e-2, rtol=1e-2), "mismatch vs reference (case 1)"

    # Case 2: ragged M (=21) and D_h (=96) -> exercises masked boundary blocks
    # (no jnp.pad of x or the weights anywhere in the wrapper).
    x, w1, b1, w2, b2 = _make_inputs(k1, 3, 7, 64, 96)
    out = jax.block_until_ready(swiglu(x, w1, b1, w2, b2))
    ref = swiglu_ref(x, w1, b1, w2, b2)
    assert out.shape == ref.shape
    assert jnp.allclose(out, ref, atol=1e-2, rtol=1e-2), "mismatch vs reference (case 2)"

    # Case 3: bf16 MXU path (what you'd run on v6e/v7x), f32 accumulation.
    x, w1, b1, w2, b2 = _make_inputs(k2, 2, 128, 128, 256)
    out = jax.block_until_ready(
        swiglu(x, w1, b1, w2, b2, compute_dtype=jnp.bfloat16)
    )
    ref = swiglu_ref(x, w1, b1, w2, b2)
    assert out.shape == ref.shape
    assert jnp.allclose(out, ref, atol=5e-2, rtol=5e-2), "mismatch vs reference (case 3 bf16)"

    print("KERNEL_OK")
</pallas_src>

<mosaic_0001>
module attributes {stable_mosaic.version = 11 : i64} {
  func.func @swiglu_kernel(%arg0: i32, %arg1: i32, %arg2: memref<16x32xf32, #tpu.memory_space<vmem>>, %arg3: memref<32x128xf32, #tpu.memory_space<vmem>>, %arg4: memref<1x128xf32, #tpu.memory_space<vmem>>, %arg5: memref<32x128xf32, #tpu.memory_space<vmem>>, %arg6: memref<1x128xf32, #tpu.memory_space<vmem>>, %arg7: memref<16x128xf32, #tpu.memory_space<vmem>>) attributes {dimension_semantics = [#tpu.dimension_semantics<parallel>, #tpu.dimension_semantics<parallel>], iteration_bounds = array<i64: 1, 1>, scalar_prefetch = 0 : i64, scratch_operands = 0 : i64, tpu.core_type = #tpu.core_type<tc>, window_params = [{transform_indices = @transform_0, window_bounds = array<i64: 16, 32>}, {transform_indices = @transform_1, window_bounds = array<i64: 32, 128>}, {transform_indices = @transform_2, window_bounds = array<i64: 1, 128>}, {transform_indices = @transform_3, window_bounds = array<i64: 32, 128>}, {transform_indices = @transform_4, window_bounds = array<i64: 1, 128>}, {transform_indices = @transform_5, window_bounds = array<i64: 16, 128>}]} {
    %c0 = arith.constant 0 : index
    %c0_0 = arith.constant 0 : index
    %0 = vector.load %arg2[%c0, %c0_0] : memref<16x32xf32, #tpu.memory_space<vmem>>, vector<16x32xf32>
    %c0_1 = arith.constant 0 : index
    %c0_2 = arith.constant 0 : index
    %1 = vector.load %arg3[%c0_1, %c0_2] : memref<32x128xf32, #tpu.memory_space<vmem>>, vector<32x128xf32>
    %cst = arith.constant dense<0.000000e+00> : vector<16x128xf32>
    %2 = tpu.matmul %0, %1, %cst {dimension_numbers = #tpu.dot_dimension_numbers<[1], [0], [0], [1], [0, 0, 1, 1], [], []>} : vector<16x32xf32>, vector<32x128xf32>, vector<16x128xf32> -> vector<16x128xf32>
    %c0_3 = arith.constant 0 : index
    %c0_4 = arith.constant 0 : index
    %3 = vector.load %arg4[%c0_3, %c0_4] : memref<1x128xf32, #tpu.memory_space<vmem>>, vector<1x128xf32>
    %4 = vector.broadcast %3 : vector<1x128xf32> to vector<16x128xf32>
    %5 = arith.addf %2, %4 : vector<16x128xf32>
    %c0_5 = arith.constant 0 : index
    %c0_6 = arith.constant 0 : index
    %6 = vector.load %arg5[%c0_5, %c0_6] : memref<32x128xf32, #tpu.memory_space<vmem>>, vector<32x128xf32>
    %cst_7 = arith.constant dense<0.000000e+00> : vector<16x128xf32>
    %7 = tpu.matmul %0, %6, %cst_7 {dimension_numbers = #tpu.dot_dimension_numbers<[1], [0], [0], [1], [0, 0, 1, 1], [], []>} : vector<16x32xf32>, vector<32x128xf32>, vector<16x128xf32> -> vector<16x128xf32>
    %c0_8 = arith.constant 0 : index
    %c0_9 = arith.constant 0 : index
    %8 = vector.load %arg6[%c0_8, %c0_9] : memref<1x128xf32, #tpu.memory_space<vmem>>, vector<1x128xf32>
    %9 = vector.broadcast %8 : vector<1x128xf32> to vector<16x128xf32>
    %10 = arith.addf %7, %9 : vector<16x128xf32>
    %cst_10 = arith.constant 0.000000e+00 : f32
    %11 = vector.broadcast %cst_10 : f32 to vector<16x128xf32>
    %12 = arith.subf %11, %5 : vector<16x128xf32>
    %13 = math.exp %12 : vector<16x128xf32>
    %cst_11 = arith.constant 1.000000e+00 : f32
    %14 = vector.broadcast %cst_11 : f32 to vector<16x128xf32>
    %15 = arith.addf %14, %13 : vector<16x128xf32>
    %16 = tpu.reciprocal %15 {approx = true} : vector<16x128xf32> -> vector<16x128xf32>
    %17 = arith.mulf %5, %16 : vector<16x128xf32>
    %18 = arith.mulf %17, %10 : vector<16x128xf32>
    %c0_12 = arith.constant 0 : index
    %c0_13 = arith.constant 0 : index
    %19 = vector.load %arg7[%c0_12, %c0_13] : memref<16x128xf32, #tpu.memory_space<vmem>>, vector<16x128xf32>
    tpu.vector_store %arg7[%c0_12, %c0_13], %18 {strides = array<i32>} : memref<16x128xf32, #tpu.memory_space<vmem>>, vector<16x128xf32>,
    return
  }
  func.func @transform_0(%arg0: i32, %arg1: i32) -> (i32, i32) {
    %c0_i32 = arith.constant 0 : i32
    %c0_i32_0 = arith.constant 0 : i32
    return %arg1, %c0_i32 : i32, i32
  }
  func.func @transform_1(%arg0: i32, %arg1: i32) -> (i32, i32) {
    %c0_i32 = arith.constant 0 : i32
    %c0_i32_0 = arith.constant 0 : i32
    return %c0_i32, %arg0 : i32, i32
  }
  func.func @transform_2(%arg0: i32, %arg1: i32) -> (i32, i32) {
    %c0_i32 = arith.constant 0 : i32
    %c0_i32_0 = arith.constant 0 : i32
    return %c0_i32, %arg0 : i32, i32
  }
  func.func @transform_3(%arg0: i32, %arg1: i32) -> (i32, i32) {
    %c0_i32 = arith.constant 0 : i32
    %c0_i32_0 = arith.constant 0 : i32
    return %c0_i32, %arg0 : i32, i32
  }
  func.func @transform_4(%arg0: i32, %arg1: i32) -> (i32, i32) {
    %c0_i32 = arith.constant 0 : i32
    %c0_i32_0 = arith.constant 0 : i32
    return %c0_i32, %arg0 : i32, i32
  }
  func.func @transform_5(%arg0: i32, %arg1: i32) -> (i32, i32) {
    %c0_i32 = arith.constant 0 : i32
    return %arg1, %arg0 : i32, i32
  }
}

</mosaic_0001>

<llo_original>
// kernel: tpu_custom_call.1
$region0: #{tpu_custom_call.1}
  #allocation0 [shape = 'u32[]', space=smem, size = 0x4, offset = 0x4, fixed_abs, tag = 'smem constant byte address 0x4 - core index']
  #allocation1 [shape = 'u32[144,128]{1,0:T(1,128)}', space=vmem, size = 0x12000, scoped, tag = 'internal scratch']
  %s0 = inlined_call_operand.hbm [shape: f32[16,32], index: 0, kind: input, shape index: {}]
  %s1 = inlined_call_operand.hbm [shape: f32[32,32], index: 1, kind: input, shape index: {}]
  %s2 = inlined_call_operand.vmem [shape: f32[1,32], index: 2, kind: input, shape index: {}]
  %s3 = inlined_call_operand.hbm [shape: f32[32,32], index: 3, kind: input, shape index: {}]
  %s4 = inlined_call_operand.vmem [shape: f32[1,32], index: 4, kind: input, shape index: {}]
  %s5 = inlined_call_operand.hbm [shape: f32[16,32], index: 5, kind: output, shape index: {}]
  %s6 = sld [smem:[#allocation0]]
  $region42: #{tpu_custom_call.1} parent=0
    _
  %s8 = ssub.s32 1, %s6
  %s9 = scalar_select 0, %s8, %s6
  $region1: #{tpu_custom_call.1} parent=0
    #allocation2 [shape = 'u8[8192]{0}', space=vmem, size = 0x2000, scoped, tag = 'input window, operand 0, single buffered']
    #allocation3 [shape = 's32[1]{0}', space=sflag, size = 0x4, scoped, tag = 'scoped memory for tpu_custom_call.1']
    #allocation4 [shape = 's32[1]{0}', space=sflag, size = 0x4, scoped, tag = 'scoped memory for tpu_custom_call.1']
    #allocation5 [shape = 'u8[16384]{0}', space=vmem, size = 0x4000, scoped, tag = 'input window, operand 1, single buffered']
    #allocation6 [shape = 's32[1]{0}', space=sflag, size = 0x4, scoped, tag = 'scoped memory for tpu_custom_call.1']
    #allocation7 [shape = 'u8[16384]{0}', space=vmem, size = 0x4000, scoped, tag = 'input window, operand 3, single buffered']
    #allocation8 [shape = 'u8[8192]{0}', space=vmem, size = 0x2000, scoped, tag = 'output window, operand 0, single buffered']
    %10 = vsyncpa [#allocation3], 0
    %11 = vsyncpa [#allocation6], 0
    %12 = vsyncpa [#allocation4], 0
    // Predicated region
    $region2: #{tpu_custom_call.1} parent=1 // pred_check
      _
    $region3: #{tpu_custom_call.1} parent=1 // pred_check_branch
      %14 = sbr.rel (0) target = $region5
    $region4: #{tpu_custom_call.1} parent=1 // pred_region
      %s16 = ssub.s32 256, 256
      %17 = vsyncadd [#allocation3], %s16
      %s18 = sshll.u32 [#allocation2], 4
      %s19 = int_to_ptr.vmem [resolvable:$true] %s18
      %24 = dma.hbm_to_vmem [thread:$0]  %s0, 256, %s19, [#allocation3], 128, 128, 8
    $region5: #{tpu_custom_call.1} parent=1 // pred_fallthru
      _
    // Predicated region
    $region6: #{tpu_custom_call.1} parent=1 // pred_check
      _
    $region7: #{tpu_custom_call.1} parent=1 // pred_check_branch
      %26 = sbr.rel (0) target = $region9
    $region8: #{tpu_custom_call.1} parent=1 // pred_region
      %s28 = ssub.s32 512, 512
      %29 = vsyncadd [#allocation6], %s28
      %s30 = sshll.u32 [#allocation5], 4
      %s31 = int_to_ptr.vmem [resolvable:$true] %s30
      %36 = dma.hbm_to_vmem [thread:$0]  %s1, 512, %s31, [#allocation6], 128, 128, 8
    $region9: #{tpu_custom_call.1} parent=1 // pred_fallthru
      _
    // Predicated region
    $region10: #{tpu_custom_call.1} parent=1 // pred_check
      _
    $region11: #{tpu_custom_call.1} parent=1 // pred_check_branch
      %38 = sbr.rel (0) target = $region13
    $region12: #{tpu_custom_call.1} parent=1 // pred_region
      _
    $region13: #{tpu_custom_call.1} parent=1 // pred_fallthru
      _
    // Predicated region
    $region14: #{tpu_custom_call.1} parent=1 // pred_check
      _
    $region15: #{tpu_custom_call.1} parent=1 // pred_check_branch
      %40 = sbr.rel (0) target = $region17
    $region16: #{tpu_custom_call.1} parent=1 // pred_region
      %s42 = ssub.s32 512, 512
      %43 = vsyncadd [#allocation6], %s42
      %s44 = sshll.u32 [#allocation7], 4
      %s45 = int_to_ptr.vmem [resolvable:$true] %s44
      %50 = dma.hbm_to_vmem [thread:$0]  %s3, 512, %s45, [#allocation6], 128, 128, 8
    $region17: #{tpu_custom_call.1} parent=1 // pred_fallthru
      _
    // Predicated region
    $region18: #{tpu_custom_call.1} parent=1 // pred_check
      _
    $region19: #{tpu_custom_call.1} parent=1 // pred_check_branch
      %52 = sbr.rel (0) target = $region21
    $region20: #{tpu_custom_call.1} parent=1 // pred_region
      _
    $region21: #{tpu_custom_call.1} parent=1 // pred_fallthru
      _
    // Predicated region
    $region22: #{tpu_custom_call.1} parent=1 // pred_check
      _
    $region23: #{tpu_custom_call.1} parent=1 // pred_check_branch
      %54 = sbr.rel (0) target = $region25
    $region24: #{tpu_custom_call.1} parent=1 // pred_region
      %55 = dma.done [#allocation3], 256
    $region25: #{tpu_custom_call.1} parent=1 // pred_fallthru
      _
    // Predicated region
    $region26: #{tpu_custom_call.1} parent=1 // pred_check
      _
    $region27: #{tpu_custom_call.1} parent=1 // pred_check_branch
      %57 = sbr.rel (0) target = $region29
    $region28: #{tpu_custom_call.1} parent=1 // pred_region
      %58 = dma.done [#allocation6], 512
    $region29: #{tpu_custom_call.1} parent=1 // pred_fallthru
      _
    // Predicated region
    $region30: #{tpu_custom_call.1} parent=1 // pred_check
      _
    $region31: #{tpu_custom_call.1} parent=1 // pred_check_branch
      %60 = sbr.rel (0) target = $region33
    $region32: #{tpu_custom_call.1} parent=1 // pred_region
      %61 = dma.done [#allocation6], 512
    $region33: #{tpu_custom_call.1} parent=1 // pred_fallthru
      _
    %v62 = vld [vmem:[#allocation2] sm:$0xff]
    %v63 = vld [vmem:[#allocation2 + $0x8] sm:$0xff]
    %v64 = vld [vmem:[#allocation5] sm:$0xff]
    %v65 = vld [vmem:[#allocation5 + $0x8] sm:$0xff]
    %v66 = vld [vmem:[#allocation5 + $0x10] sm:$0xff]
    %v67 = vld [vmem:[#allocation5 + $0x18] sm:$0xff]
    %v68 = vld [vmem:[%s2] sm:$0x1]
    %v70 = vlaneseq
    %v71 = vshrl.u32 %v70, 7
    %v72 = vsub.s32 0, %v71
    %v73 = vrot.slane %v68, %v72
    %vm75 = vcmask 261120
    %v77 = vsel %vm75, %v62, 0
    %v80 = vsel %vm75, %v63, 0
    %82 = vmatprep.subr.mxu0 0.0
    %83 = vmatpush1.msra.mxu0 0.0
    %84 = vmatprep.subr.mxu0 0.0
    %85 = vmatpush1.msra.mxu0 0.0
    %86 = vmatprep.subr.mxu0 0.0
    %87 = vmatpush1.msra.mxu0 0.0
    %88 = vmatprep.subr.mxu0 0.0
    %89 = vmatpush1.msra.mxu0 0.0
    %90 = vmatprep.subr.mxu0 0.0
    %91 = vmatpush1.msra.mxu0 0.0
    %92 = vmatprep.subr.mxu0 0.0
    %93 = vmatpush1.msra.mxu0 0.0
    %94 = vmatprep.subr.mxu0 0.0
    %95 = vmatpush1.msra.mxu0 0.0
    %96 = vmatprep.subr.mxu0 0.0
    %97 = vmatpush1.msra.mxu0 0.0
    %98 = vmatprep.subr.mxu0 0.0
    %99 = vmatpush1.msra.mxu0 0.0
    %100 = vmatprep.subr.mxu0 0.0
    %101 = vmatpush1.msra.mxu0 0.0
    %102 = vmatprep.subr.mxu0 0.0
    %103 = vmatpush1.msra.mxu0 0.0
    %104 = vmatprep.subr.mxu0 0.0
    %105 = vmatpush1.msra.mxu0 0.0
    %106 = vmatprep.subr.mxu0 0.0
    %107 = vmatpush1.msra.mxu0 %v67
    %108 = vmatprep.subr.mxu0 0.0
    %109 = vmatpush1.msra.mxu0 %v66
    %110 = vmatprep.subr.mxu0 0.0
    %111 = vmatpush1.msra.mxu0 %v65
    %112 = vmatprep.subr.mxu0 0.0
    %113 = vmatpush1.msra.mxu0 %v64
    %114 = vmatprep.subr.mxu0 0.0
    %115 = vmatpush2.msra.mxu0 0.0
    %116 = vmatprep.subr.mxu0 0.0
    %117 = vmatpush2.msra.mxu0 0.0
    %118 = vmatprep.subr.mxu0 0.0
    %119 = vmatpush2.msra.mxu0 0.0
    %120 = vmatprep.subr.mxu0 0.0
    %121 = vmatpush2.msra.mxu0 0.0
    %122 = vmatprep.subr.mxu0 0.0
    %123 = vmatpush2.msra.mxu0 0.0
    %124 = vmatprep.subr.mxu0 0.0
    %125 = vmatpush2.msra.mxu0 0.0
    %126 = vmatprep.subr.mxu0 0.0
    %127 = vmatpush2.msra.mxu0 0.0
    %128 = vmatprep.subr.mxu0 0.0
    %129 = vmatpush2.msra.mxu0 0.0
    %130 = vmatprep.subr.mxu0 0.0
    %131 = vmatpush2.msra.mxu0 0.0
    %132 = vmatprep.subr.mxu0 0.0
    %133 = vmatpush2.msra.mxu0 0.0
    %134 = vmatprep.subr.mxu0 0.0
    %135 = vmatpush2.msra.mxu0 0.0
    %136 = vmatprep.subr.mxu0 0.0
    %137 = vmatpush2.msra.mxu0 0.0
    %138 = vmatprep.subr.mxu0 0.0
    %139 = vmatpush2.msra.mxu0 0.0
    %140 = vmatprep.subr.mxu0 0.0
    %141 = vmatpush2.msra.mxu0 0.0
    %142 = vmatprep.subr.mxu0 0.0
    %143 = vmatpush2.msra.mxu0 0.0
    %144 = vmatprep.subr.mxu0 0.0
    %145 = vmatpush2.msra.mxu0 0.0
    %146 = vmatprep.mubr.f32.mxu0 0.0
    %147 = vmatmul.mubr.f32.gmra.mxu0 %v77
    %v148 = vpop.f32.mrf.mxu0
    %v149 = vadd.f32 %v73, %v148
    %v150 = vpop.f32.mrf.mxu0
    %151 = vmatprep.mubr.f32.mxu0 0.0
    %152 = vmatmul.mubr.f32.gmra.mxu0 %v80
    %v153 = vpop.f32.mrf.mxu0
    %v154 = vadd.f32 %v73, %v153
    %v155 = vpop.f32.mrf.mxu0
    %156 = vdwg.mxu0
    %v157 = vld [vmem:[#allocation7] sm:$0xff]
    %v158 = vld [vmem:[#allocation7 + $0x8] sm:$0xff]
    %v159 = vld [vmem:[#allocation7 + $0x10] sm:$0xff]
    %v160 = vld [vmem:[#allocation7 + $0x18] sm:$0xff]
    %v161 = vld [vmem:[%s4] sm:$0x1]
    %v163 = vlaneseq
    %v164 = vshrl.u32 %v163, 7
    %v165 = vsub.s32 0, %v164
    %v166 = vrot.slane %v161, %v165
    %168 = vmatprep.subr.mxu0 0.0
    %169 = vmatpush1.msra.mxu0 0.0
    %170 = vmatprep.subr.mxu0 0.0
    %171 = vmatpush1.msra.mxu0 0.0
    %172 = vmatprep.subr.mxu0 0.0
    %173 = vmatpush1.msra.mxu0 0.0
    %174 = vmatprep.subr.mxu0 0.0
    %175 = vmatpush1.msra.mxu0 0.0
    %176 = vmatprep.subr.mxu0 0.0
    %177 = vmatpush1.msra.mxu0 0.0
    %178 = vmatprep.subr.mxu0 0.0
    %179 = vmatpush1.msra.mxu0 0.0
    %180 = vmatprep.subr.mxu0 0.0
    %181 = vmatpush1.msra.mxu0 0.0
    %182 = vmatprep.subr.mxu0 0.0
    %183 = vmatpush1.msra.mxu0 0.0
    %184 = vmatprep.subr.mxu0 0.0
    %185 = vmatpush1.msra.mxu0 0.0
    %186 = vmatprep.subr.mxu0 0.0
    %187 = vmatpush1.msra.mxu0 0.0
    %188 = vmatprep.subr.mxu0 0.0
    %189 = vmatpush1.msra.mxu0 0.0
    %190 = vmatprep.subr.mxu0 0.0
    %191 = vmatpush1.msra.mxu0 0.0
    %192 = vmatprep.subr.mxu0 0.0
    %193 = vmatpush1.msra.mxu0 %v160
    %194 = vmatprep.subr.mxu0 0.0
    %195 = vmatpush1.msra.mxu0 %v159
    %196 = vmatprep.subr.mxu0 0.0
    %197 = vmatpush1.msra.mxu0 %v158
    %198 = vmatprep.subr.mxu0 0.0
    %199 = vmatpush1.msra.mxu0 %v157
    %200 = vmatprep.subr.mxu0 0.0
    %201 = vmatpush2.msra.mxu0 0.0
    %202 = vmatprep.subr.mxu0 0.0
    %203 = vmatpush2.msra.mxu0 0.0
    %204 = vmatprep.subr.mxu0 0.0
    %205 = vmatpush2.msra.mxu0 0.0
    %206 = vmatprep.subr.mxu0 0.0
    %207 = vmatpush2.msra.mxu0 0.0
    %208 = vmatprep.subr.mxu0 0.0
    %209 = vmatpush2.msra.mxu0 0.0
    %210 = vmatprep.subr.mxu0 0.0
    %211 = vmatpush2.msra.mxu0 0.0
    %212 = vmatprep.subr.mxu0 0.0
    %213 = vmatpush2.msra.mxu0 0.0
    %214 = vmatprep.subr.mxu0 0.0
    %215 = vmatpush2.msra.mxu0 0.0
    %216 = vmatprep.subr.mxu0 0.0
    %217 = vmatpush2.msra.mxu0 0.0
    %218 = vmatprep.subr.mxu0 0.0
    %219 = vmatpush2.msra.mxu0 0.0
    %220 = vmatprep.subr.mxu0 0.0
    %221 = vmatpush2.msra.mxu0 0.0
    %222 = vmatprep.subr.mxu0 0.0
    %223 = vmatpush2.msra.mxu0 0.0
    %224 = vmatprep.subr.mxu0 0.0
    %225 = vmatpush2.msra.mxu0 0.0
    %226 = vmatprep.subr.mxu0 0.0
    %227 = vmatpush2.msra.mxu0 0.0
    %228 = vmatprep.subr.mxu0 0.0
    %229 = vmatpush2.msra.mxu0 0.0
    %230 = vmatprep.subr.mxu0 0.0
    %231 = vmatpush2.msra.mxu0 0.0
    %232 = vmatprep.mubr.f32.mxu0 0.0
    %233 = vmatmul.mubr.f32.gmra.mxu0 %v77
    %v234 = vpop.f32.mrf.mxu0
    %v235 = vadd.f32 %v166, %v234
    %v236 = vpop.f32.mrf.mxu0
    %237 = vmatprep.mubr.f32.mxu0 0.0
    %238 = vmatmul.mubr.f32.gmra.mxu0 %v80
    %v239 = vpop.f32.mrf.mxu0
    %v240 = vadd.f32 %v166, %v239
    %v241 = vpop.f32.mrf.mxu0
    %242 = vdwg.mxu0
    %v243 = vsub.f32 0.0, %v149
    %v244 = vsub.f32 0.0, %v154
    %v245 = vmul.f32 %v243, 1.442695
    %v246 = vpow.pop %v245
    %v247 = vmul.f32 %v244, 1.442695
    %v248 = vpow.pop %v247
    %v249 = vadd.f32 %v246, 1.0
    %v250 = vadd.f32 %v248, 1.0
    %v251 = vrcp.pop %v249
    %v252 = vrcp.pop %v250
    %v253 = vmul.f32 %v149, %v251
    %v254 = vmul.f32 %v154, %v252
    %v255 = vmul.f32 %v253, %v235
    %v256 = vmul.f32 %v254, %v240
    %257 = vst [vmem:[#allocation8] sm:$0xff] %v255
    %258 = vst [vmem:[#allocation8 + $0x8] sm:$0xff] %v256
    // Predicated region
    $region34: #{tpu_custom_call.1} parent=1 // pred_check
      _
    $region35: #{tpu_custom_call.1} parent=1 // pred_check_branch
      %260 = sbr.rel (0) target = $region37
    $region36: #{tpu_custom_call.1} parent=1 // pred_region
      %s262 = ssub.s32 256, 256
      %263 = vsyncadd [#allocation4], %s262
      %s264 = sshll.u32 [#allocation8], 4
      %s265 = int_to_ptr.vmem [resolvable:$true] %s264
      %270 = dma.vmem_to_hbm [thread:$0]  %s265, 256, %s5, [#allocation4], 128, 128, 8
    $region37: #{tpu_custom_call.1} parent=1 // pred_fallthru
      _
    // Predicated region
    $region38: #{tpu_custom_call.1} parent=1 // pred_check
      _
    $region39: #{tpu_custom_call.1} parent=1 // pred_check_branch
      %272 = sbr.rel (0) target = $region41
    $region40: #{tpu_custom_call.1} parent=1 // pred_region
      %273 = dma.done [#allocation4], 256
    $region41: #{tpu_custom_call.1} parent=1 // pred_fallthru
      _
    %274 = vsyncpa [#allocation3], 1
    %275 = vsyncpa [#allocation6], 1
    %276 = vsyncpa [#allocation4], 1

</llo_original>
